<compile_context>
chip_gen: v6e
topology: v6e:2x2x1
jax: 0.10.0
libtpu: 0.0.40
codegen_flags: <defaults>
</compile_context>

<pallas_src>
import math
import functools

import jax
import jax.numpy as jnp
import numpy as np
from jax.experimental import pallas as pl
from jax.experimental.pallas import tpu as pltpu


def _cross_attention_kernel(q_ref, k_ref, v_ref, wq_ref, wk_ref, wv_ref,
                            wp_ref, bp_ref, out_ref, *attw_refs,
                            n_head, hidden_dim, batch, lq, lkv, store_attw):
    """Fused multi-head cross-attention + output projection, all batches in one step.

    q_ref:  (B*Lq,  Eq)  f32      wq_ref: (Eq,  n_head*H) bf16 (1/sqrt(H) pre-folded)
    k_ref:  (B*Lkv, Ekv) f32      wk_ref: (Ekv, n_head*H) bf16
    v_ref:  (B*Lkv, Ekv) f32      wv_ref: (Ekv, n_head*H) bf16
    wp_ref: (n_head*H, Eq) bf16   bp_ref: (1, Eq) f32
    out_ref:  (B*Lq, Eq) f32      attw_refs[0] (optional): (n_head*B, Lq, Lkv) f32
    """
    attw_ref = attw_refs[0] if store_attw else None

    # Cast activations once for single-pass bf16 MXU feeds (f32 accumulation below).
    q2 = q_ref[...].astype(jnp.bfloat16)
    k2 = k_ref[...].astype(jnp.bfloat16)
    v2 = v_ref[...].astype(jnp.bfloat16)

    # Batch-fused-M, head-fused-N projections: one wide matmul per operand.
    q_all = jnp.dot(q2, wq_ref[...], preferred_element_type=jnp.float32)   # (B*Lq,  HD)
    k_all = jnp.dot(k2, wk_ref[...], preferred_element_type=jnp.float32)   # (B*Lkv, HD)
    v_all = jnp.dot(v2, wv_ref[...], preferred_element_type=jnp.float32)   # (B*Lkv, HD)

    bias = bp_ref[...]                                                     # (1, Eout) f32

    for b in range(batch):          # static unroll; B is small
        rq0, rk0 = b * lq, b * lkv
        acc = None
        for h in range(n_head):     # static unroll; n_head is small
            c0 = h * hidden_dim
            q_h = q_all[rq0:rq0 + lq, c0:c0 + hidden_dim]                  # (Lq,  H)
            k_h = k_all[rk0:rk0 + lkv, c0:c0 + hidden_dim]                 # (Lkv, H)
            v_h = v_all[rk0:rk0 + lkv, c0:c0 + hidden_dim]                 # (Lkv, H)

            # Contract last dims of both operands -> no explicit transpose through the XLU.
            s = jax.lax.dot_general(q_h.astype(jnp.bfloat16), k_h.astype(jnp.bfloat16),
                                    (((1,), (1,)), ((), ())),
                                    preferred_element_type=jnp.float32)    # (Lq, Lkv)

            # Numerically stabilized softmax in f32; divide via EUP approximate reciprocal.
            m = jnp.max(s, axis=-1, keepdims=True)
            e = jnp.exp(s - m)
            p = e * pl.reciprocal(jnp.sum(e, axis=-1, keepdims=True), approx=True)

            if store_attw:
                # torch layout: attention_weights index = h * B + b (head-major).
                attw_ref[h * batch + b, :, :] = p.astype(attw_ref.dtype)

            o_h = jnp.dot(p.astype(jnp.bfloat16), v_h.astype(jnp.bfloat16),
                          preferred_element_type=jnp.float32)              # (Lq, H)

            # Per-head projection accumulation (== head-major concat followed by x @ Wp).
            term = jnp.dot(o_h.astype(jnp.bfloat16), wp_ref[c0:c0 + hidden_dim, :],
                           preferred_element_type=jnp.float32)             # (Lq, Eout)
            acc = term if acc is None else acc + term

        out_ref[rq0:rq0 + lq, :] = (acc + bias).astype(out_ref.dtype)


def fuse_params(params):
    """One-time parameter transform: fuse per-head projection weights along the lane dim
    (head-major, matching the torch concat order), fold 1/sqrt(H) into w_q, pre-transpose
    the output-projection weight to (in, out), and pre-cast all MXU weights to bf16."""
    wq, wk, wv = params["w_q"], params["w_k"], params["w_v"]
    n_head, Eq, H = wq.shape
    Ekv = wk.shape[1]
    scale = 1.0 / math.sqrt(H)
    return {
        # fused[e, h*H + d] = w[h, e, d]
        "wq": (jnp.transpose(wq, (1, 0, 2)).reshape(Eq, n_head * H) * scale).astype(jnp.bfloat16),
        "wk": jnp.transpose(wk, (1, 0, 2)).reshape(Ekv, n_head * H).astype(jnp.bfloat16),
        "wv": jnp.transpose(wv, (1, 0, 2)).reshape(Ekv, n_head * H).astype(jnp.bfloat16),
        "proj_wt": params["proj_w"].T.astype(jnp.bfloat16),          # (n_head*H, Eq)
        "proj_b": params["proj_b"].reshape(1, -1).astype(jnp.float32),  # (1, Eq)
        "n_head": n_head,
        "hidden_dim": H,
    }


def cross_attention_forward(query, key, value, fused, mask=None,
                            return_attention_weights=True):
    """Pallas forward pass. Returns (out, attention_weights) like the PyTorch module."""
    if mask is not None:
        # TODO(synk): masked_fill path not implemented.
        raise NotImplementedError("mask is not supported in the Pallas CrossAttention kernel")

    n_head, H = fused["n_head"], fused["hidden_dim"]
    wq_f, wk_f, wv_f = fused["wq"], fused["wk"], fused["wv"]
    proj_wt, proj_b = fused["proj_wt"], fused["proj_b"]

    Eq, HD = wq_f.shape
    Ekv = wk_f.shape[0]
    Eout = proj_wt.shape[1]
    B, Lq, _ = query.shape
    _, Lkv, _ = key.shape

    # Fold batch into the matmul M dimension (free metadata reshapes).
    q2 = query.reshape(B * Lq, Eq)
    k2 = key.reshape(B * Lkv, Ekv)
    v2 = value.reshape(B * Lkv, Ekv)

    out_shape = [jax.ShapeDtypeStruct((B * Lq, Eout), jnp.float32)]
    out_specs = [pl.BlockSpec((B * Lq, Eout), lambda i: (0, 0))]
    if return_attention_weights:
        out_shape.append(jax.ShapeDtypeStruct((n_head * B, Lq, Lkv), jnp.float32))
        out_specs.append(pl.BlockSpec((n_head * B, Lq, Lkv), lambda i: (0, 0, 0)))

    kernel = functools.partial(
        _cross_attention_kernel,
        n_head=n_head, hidden_dim=H, batch=B, lq=Lq, lkv=Lkv,
        store_attw=return_attention_weights)

    results = pl.pallas_call(
        kernel,
        grid=(1,),  # single invocation: total work is tiny, fixed per-step overhead dominates
        in_specs=[
            pl.BlockSpec((B * Lq, Eq), lambda i: (0, 0)),     # query  (batch folded into M)
            pl.BlockSpec((B * Lkv, Ekv), lambda i: (0, 0)),   # key
            pl.BlockSpec((B * Lkv, Ekv), lambda i: (0, 0)),   # value
            pl.BlockSpec((Eq, HD), lambda i: (0, 0)),         # fused w_q (scaled, bf16)
            pl.BlockSpec((Ekv, HD), lambda i: (0, 0)),        # fused w_k (bf16)
            pl.BlockSpec((Ekv, HD), lambda i: (0, 0)),        # fused w_v (bf16)
            pl.BlockSpec((HD, Eout), lambda i: (0, 0)),       # proj weight (in, out) bf16
            pl.BlockSpec((1, Eout), lambda i: (0, 0)),        # proj bias f32
        ],
        out_specs=out_specs,
        out_shape=out_shape,
        compiler_params=pltpu.CompilerParams(dimension_semantics=("arbitrary",)),
    )(q2, k2, v2, wq_f, wk_f, wv_f, proj_wt, proj_b)

    out = results[0].reshape(B, Lq, Eout)
    if return_attention_weights:
        # torch attention_weights shape: (n_head*B, Lq, Lkv), head-major along dim 0.
        return out, results[1]
    # Dropout(p=0.1): identity in eval/inference mode.
    return out, None


# -------------------- pure-JAX reference (for correctness check) --------------------
def cross_attention_ref(query, key, value, params):
    hp = jax.lax.Precision.HIGHEST
    wq, wk, wv = params["w_q"], params["w_k"], params["w_v"]
    proj_w, proj_b = params["proj_w"], params["proj_b"]
    n_head, Eq, H = wq.shape
    B, Lq, _ = query.shape
    _, Lkv, Ekv = key.shape

    q = jnp.einsum("bqe,hed->hbqd", query, wq, precision=hp)   # (n_head, B, Lq, H)
    k = jnp.einsum("bke,hed->hbkd", key, wk, precision=hp)     # (n_head, B, Lkv, H)
    v = jnp.einsum("bke,hed->hbkd", value, wv, precision=hp)   # (n_head, B, Lkv, H)
    score = jnp.einsum("hbqd,hbkd->hbqk", q, k, precision=hp) / math.sqrt(H)
    attw = jax.nn.softmax(score, axis=-1)
    out = jnp.einsum("hbqk,hbkd->hbqd", attw, v, precision=hp)            # (n_head, B, Lq, H)
    out = jnp.transpose(out, (1, 2, 0, 3)).reshape(B, Lq, n_head * H)     # head-major concat
    out = jnp.einsum("bqi,oi->bqo", out, proj_w, precision=hp) + proj_b
    return out, attw.reshape(n_head * B, Lq, Lkv)


def _xavier_uniform(key, shape, fan_in, fan_out, dtype=jnp.float32):
    bound = math.sqrt(6.0 / (fan_in + fan_out))
    return jax.random.uniform(key, shape, dtype=dtype, minval=-bound, maxval=bound)


if __name__ == "__main__":
    # Small, module-consistent shapes.
    B, Lq, Lkv = 2, 8, 8
    embed_dim_q, embed_dim_kv = 32, 24
    n_head = 2
    hidden_dim = embed_dim_q // n_head  # default in __init__ -> 16

    root = jax.random.PRNGKey(0)
    k_q, k_k, k_v, k_wq, k_wk, k_wv, k_pw, k_pb = jax.random.split(root, 8)

    query = jax.random.normal(k_q, (B, Lq, embed_dim_q), dtype=jnp.float32)
    key = jax.random.normal(k_k, (B, Lkv, embed_dim_kv), dtype=jnp.float32)
    value = jax.random.normal(k_v, (B, Lkv, embed_dim_kv), dtype=jnp.float32)

    params = {
        # xavier_uniform_ on 3-D tensors: fan_in = dim1 * dim2..., fan_out = dim0 * dim2...
        "w_q": _xavier_uniform(k_wq, (n_head, embed_dim_q, hidden_dim),
                               embed_dim_q * hidden_dim, n_head * hidden_dim),
        "w_k": _xavier_uniform(k_wk, (n_head, embed_dim_kv, hidden_dim),
                               embed_dim_kv * hidden_dim, n_head * hidden_dim),
        "w_v": _xavier_uniform(k_wv, (n_head, embed_dim_kv, hidden_dim),
                               embed_dim_kv * hidden_dim, n_head * hidden_dim),
        "proj_w": _xavier_uniform(k_pw, (embed_dim_q, n_head * hidden_dim),
                                  n_head * hidden_dim, embed_dim_q),
        "proj_b": jnp.zeros((embed_dim_q,), dtype=jnp.float32),
    }

    fused = fuse_params(params)

    out, attw = cross_attention_forward(query, key, value, fused)
    out = jax.block_until_ready(out)
    attw = jax.block_until_ready(attw)

    out_ref, attw_ref = cross_attention_ref(query, key, value, params)

    assert out.shape == (B, Lq, embed_dim_q), out.shape
    assert attw.shape == (n_head * B, Lq, Lkv), attw.shape
    # bf16 MXU operands + approximate reciprocal => looser tolerance than an f32-emulated
    # matmul path; values are O(0.1-1) so these bounds remain a meaningful check.
    np.testing.assert_allclose(np.asarray(out), np.asarray(out_ref), rtol=4e-2, atol=4e-2)
    np.testing.assert_allclose(np.asarray(attw), np.asarray(attw_ref), rtol=3e-2, atol=2e-2)

    print("KERNEL_OK")
</pallas_src>

<mosaic_0001>
module attributes {stable_mosaic.version = 11 : i64} {
  func.func @_cross_attention_kernel(%arg0: i32, %arg1: memref<16x32xf32, #tpu.memory_space<vmem>>, %arg2: memref<16x24xf32, #tpu.memory_space<vmem>>, %arg3: memref<16x24xf32, #tpu.memory_space<vmem>>, %arg4: memref<32x32xbf16, #tpu.memory_space<vmem>>, %arg5: memref<24x32xbf16, #tpu.memory_space<vmem>>, %arg6: memref<24x32xbf16, #tpu.memory_space<vmem>>, %arg7: memref<32x32xbf16, #tpu.memory_space<vmem>>, %arg8: memref<1x32xf32, #tpu.memory_space<vmem>>, %arg9: memref<16x32xf32, #tpu.memory_space<vmem>>, %arg10: memref<4x8x8xf32, #tpu.memory_space<vmem>>) attributes {dimension_semantics = [#tpu.dimension_semantics<arbitrary>], iteration_bounds = array<i64: 1>, scalar_prefetch = 0 : i64, scratch_operands = 0 : i64, tpu.core_type = #tpu.core_type<tc>, window_params = [{pipeline_mode = #tpu.pipeline_mode<synchronous>, transform_indices = @transform_0, window_bounds = array<i64: 16, 32>}, {pipeline_mode = #tpu.pipeline_mode<synchronous>, transform_indices = @transform_1, window_bounds = array<i64: 16, 24>}, {pipeline_mode = #tpu.pipeline_mode<synchronous>, transform_indices = @transform_2, window_bounds = array<i64: 16, 24>}, {pipeline_mode = #tpu.pipeline_mode<synchronous>, transform_indices = @transform_3, window_bounds = array<i64: 32, 32>}, {pipeline_mode = #tpu.pipeline_mode<synchronous>, transform_indices = @transform_4, window_bounds = array<i64: 24, 32>}, {pipeline_mode = #tpu.pipeline_mode<synchronous>, transform_indices = @transform_5, window_bounds = array<i64: 24, 32>}, {pipeline_mode = #tpu.pipeline_mode<synchronous>, transform_indices = @transform_6, window_bounds = array<i64: 32, 32>}, {pipeline_mode = #tpu.pipeline_mode<synchronous>, transform_indices = @transform_7, window_bounds = array<i64: 1, 32>}, {pipeline_mode = #tpu.pipeline_mode<synchronous>, transform_indices = @transform_8, window_bounds = array<i64: 16, 32>}, {pipeline_mode = #tpu.pipeline_mode<synchronous>, transform_indices = @transform_9, window_bounds = array<i64: 4, 8, 8>}]} {
    %c0 = arith.constant 0 : index
    %c0_0 = arith.constant 0 : index
    %0 = vector.load %arg1[%c0, %c0_0] : memref<16x32xf32, #tpu.memory_space<vmem>>, vector<16x32xf32>
    %1 = arith.truncf %0 : vector<16x32xf32> to vector<16x32xbf16>
    %c0_1 = arith.constant 0 : index
    %c0_2 = arith.constant 0 : index
    %2 = vector.load %arg2[%c0_1, %c0_2] : memref<16x24xf32, #tpu.memory_space<vmem>>, vector<16x24xf32>
    %3 = arith.truncf %2 : vector<16x24xf32> to vector<16x24xbf16>
    %c0_3 = arith.constant 0 : index
    %c0_4 = arith.constant 0 : index
    %4 = vector.load %arg3[%c0_3, %c0_4] : memref<16x24xf32, #tpu.memory_space<vmem>>, vector<16x24xf32>
    %5 = arith.truncf %4 : vector<16x24xf32> to vector<16x24xbf16>
    %c0_5 = arith.constant 0 : index
    %c0_6 = arith.constant 0 : index
    %6 = vector.load %arg4[%c0_5, %c0_6] : memref<32x32xbf16, #tpu.memory_space<vmem>>, vector<32x32xbf16>
    %cst = arith.constant dense<0.000000e+00> : vector<16x32xf32>
    %7 = tpu.matmul %1, %6, %cst {dimension_numbers = #tpu.dot_dimension_numbers<[1], [0], [0], [1], [0, 0, 1, 1], [], []>} : vector<16x32xbf16>, vector<32x32xbf16>, vector<16x32xf32> -> vector<16x32xf32>
    %c0_7 = arith.constant 0 : index
    %c0_8 = arith.constant 0 : index
    %8 = vector.load %arg5[%c0_7, %c0_8] : memref<24x32xbf16, #tpu.memory_space<vmem>>, vector<24x32xbf16>
    %cst_9 = arith.constant dense<0.000000e+00> : vector<16x32xf32>
    %9 = tpu.matmul %3, %8, %cst_9 {dimension_numbers = #tpu.dot_dimension_numbers<[1], [0], [0], [1], [0, 0, 1, 1], [], []>} : vector<16x24xbf16>, vector<24x32xbf16>, vector<16x32xf32> -> vector<16x32xf32>
    %c0_10 = arith.constant 0 : index
    %c0_11 = arith.constant 0 : index
    %10 = vector.load %arg6[%c0_10, %c0_11] : memref<24x32xbf16, #tpu.memory_space<vmem>>, vector<24x32xbf16>
    %cst_12 = arith.constant dense<0.000000e+00> : vector<16x32xf32>
    %11 = tpu.matmul %5, %10, %cst_12 {dimension_numbers = #tpu.dot_dimension_numbers<[1], [0], [0], [1], [0, 0, 1, 1], [], []>} : vector<16x24xbf16>, vector<24x32xbf16>, vector<16x32xf32> -> vector<16x32xf32>
    %c0_13 = arith.constant 0 : index
    %c0_14 = arith.constant 0 : index
    %12 = vector.load %arg8[%c0_13, %c0_14] : memref<1x32xf32, #tpu.memory_space<vmem>>, vector<1x32xf32>
    %13 = vector.extract_strided_slice %7 {offsets = [0, 0], sizes = [8, 16], strides = [1, 1]} : vector<16x32xf32> to vector<8x16xf32>
    %14 = vector.extract_strided_slice %9 {offsets = [0, 0], sizes = [8, 16], strides = [1, 1]} : vector<16x32xf32> to vector<8x16xf32>
    %15 = vector.extract_strided_slice %11 {offsets = [0, 0], sizes = [8, 16], strides = [1, 1]} : vector<16x32xf32> to vector<8x16xf32>
    %16 = arith.truncf %13 : vector<8x16xf32> to vector<8x16xbf16>
    %17 = arith.truncf %14 : vector<8x16xf32> to vector<8x16xbf16>
    %cst_15 = arith.constant dense<0.000000e+00> : vector<8x8xf32>
    %18 = tpu.matmul %16, %17, %cst_15 {dimension_numbers = #tpu.dot_dimension_numbers<[1], [1], [0], [0], [0, 0, 1, 0], [], []>} : vector<8x16xbf16>, vector<8x16xbf16>, vector<8x8xf32> -> vector<8x8xf32>
    %cst_16 = arith.constant dense<0xFF800000> : vector<8xf32>
    %19 = vector.multi_reduction <maximumf>, %18, %cst_16 [1] : vector<8x8xf32> to vector<8xf32>
    %20 = vector.shape_cast %19 : vector<8xf32> to vector<8x1xf32>
    %21 = vector.broadcast %20 : vector<8x1xf32> to vector<8x8xf32>
    %22 = arith.subf %18, %21 : vector<8x8xf32>
    %23 = math.exp %22 : vector<8x8xf32>
    %cst_17 = arith.constant dense<0.000000e+00> : vector<8xf32>
    %24 = vector.multi_reduction <add>, %23, %cst_17 [1] : vector<8x8xf32> to vector<8xf32>
    %25 = vector.shape_cast %24 : vector<8xf32> to vector<8x1xf32>
    %26 = tpu.reciprocal %25 {approx = true} : vector<8x1xf32> -> vector<8x1xf32>
    %27 = vector.broadcast %26 : vector<8x1xf32> to vector<8x8xf32>
    %28 = arith.mulf %23, %27 : vector<8x8xf32>
    %c0_18 = arith.constant 0 : index
    %c0_19 = arith.constant 0 : index
    %c0_20 = arith.constant 0 : index
    %29 = vector.load %arg10[%c0_18, %c0_19, %c0_20] : memref<4x8x8xf32, #tpu.memory_space<vmem>>, vector<1x8x8xf32>
    %30 = vector.shape_cast %29 : vector<1x8x8xf32> to vector<8x8xf32>
    %31 = vector.shape_cast %28 : vector<8x8xf32> to vector<1x8x8xf32>
    tpu.vector_store %arg10[%c0_18, %c0_19, %c0_20], %31 {strides = array<i32>} : memref<4x8x8xf32, #tpu.memory_space<vmem>>, vector<1x8x8xf32>,
    %32 = arith.truncf %28 : vector<8x8xf32> to vector<8x8xbf16>
    %33 = arith.truncf %15 : vector<8x16xf32> to vector<8x16xbf16>
    %cst_21 = arith.constant dense<0.000000e+00> : vector<8x16xf32>
    %34 = tpu.matmul %32, %33, %cst_21 {dimension_numbers = #tpu.dot_dimension_numbers<[1], [0], [0], [1], [0, 0, 1, 1], [], []>} : vector<8x8xbf16>, vector<8x16xbf16>, vector<8x16xf32> -> vector<8x16xf32>
    %35 = arith.truncf %34 : vector<8x16xf32> to vector<8x16xbf16>
    %c0_22 = arith.constant 0 : index
    %c0_23 = arith.constant 0 : index
    %36 = vector.load %arg7[%c0_22, %c0_23] : memref<32x32xbf16, #tpu.memory_space<vmem>>, vector<16x32xbf16>
    %cst_24 = arith.constant dense<0.000000e+00> : vector<8x32xf32>
    %37 = tpu.matmul %35, %36, %cst_24 {dimension_numbers = #tpu.dot_dimension_numbers<[1], [0], [0], [1], [0, 0, 1, 1], [], []>} : vector<8x16xbf16>, vector<16x32xbf16>, vector<8x32xf32> -> vector<8x32xf32>
    %38 = vector.extract_strided_slice %7 {offsets = [0, 16], sizes = [8, 16], strides = [1, 1]} : vector<16x32xf32> to vector<8x16xf32>
    %39 = vector.extract_strided_slice %9 {offsets = [0, 16], sizes = [8, 16], strides = [1, 1]} : vector<16x32xf32> to vector<8x16xf32>
    %40 = vector.extract_strided_slice %11 {offsets = [0, 16], sizes = [8, 16], strides = [1, 1]} : vector<16x32xf32> to vector<8x16xf32>
    %41 = arith.truncf %38 : vector<8x16xf32> to vector<8x16xbf16>
    %42 = arith.truncf %39 : vector<8x16xf32> to vector<8x16xbf16>
    %cst_25 = arith.constant dense<0.000000e+00> : vector<8x8xf32>
    %43 = tpu.matmul %41, %42, %cst_25 {dimension_numbers = #tpu.dot_dimension_numbers<[1], [1], [0], [0], [0, 0, 1, 0], [], []>} : vector<8x16xbf16>, vector<8x16xbf16>, vector<8x8xf32> -> vector<8x8xf32>
    %cst_26 = arith.constant dense<0xFF800000> : vector<8xf32>
    %44 = vector.multi_reduction <maximumf>, %43, %cst_26 [1] : vector<8x8xf32> to vector<8xf32>
    %45 = vector.shape_cast %44 : vector<8xf32> to vector<8x1xf32>
    %46 = vector.broadcast %45 : vector<8x1xf32> to vector<8x8xf32>
    %47 = arith.subf %43, %46 : vector<8x8xf32>
    %48 = math.exp %47 : vector<8x8xf32>
    %cst_27 = arith.constant dense<0.000000e+00> : vector<8xf32>
    %49 = vector.multi_reduction <add>, %48, %cst_27 [1] : vector<8x8xf32> to vector<8xf32>
    %50 = vector.shape_cast %49 : vector<8xf32> to vector<8x1xf32>
    %51 = tpu.reciprocal %50 {approx = true} : vector<8x1xf32> -> vector<8x1xf32>
    %52 = vector.broadcast %51 : vector<8x1xf32> to vector<8x8xf32>
    %53 = arith.mulf %48, %52 : vector<8x8xf32>
    %c2 = arith.constant 2 : index
    %c0_28 = arith.constant 0 : index
    %c0_29 = arith.constant 0 : index
    %54 = vector.load %arg10[%c2, %c0_28, %c0_29] : memref<4x8x8xf32, #tpu.memory_space<vmem>>, vector<1x8x8xf32>
    %55 = vector.shape_cast %54 : vector<1x8x8xf32> to vector<8x8xf32>
    %56 = vector.shape_cast %53 : vector<8x8xf32> to vector<1x8x8xf32>
    tpu.vector_store %arg10[%c2, %c0_28, %c0_29], %56 {strides = array<i32>} : memref<4x8x8xf32, #tpu.memory_space<vmem>>, vector<1x8x8xf32>,
    %57 = arith.truncf %53 : vector<8x8xf32> to vector<8x8xbf16>
    %58 = arith.truncf %40 : vector<8x16xf32> to vector<8x16xbf16>
    %cst_30 = arith.constant dense<0.000000e+00> : vector<8x16xf32>
    %59 = tpu.matmul %57, %58, %cst_30 {dimension_numbers = #tpu.dot_dimension_numbers<[1], [0], [0], [1], [0, 0, 1, 1], [], []>} : vector<8x8xbf16>, vector<8x16xbf16>, vector<8x16xf32> -> vector<8x16xf32>
    %60 = arith.truncf %59 : vector<8x16xf32> to vector<8x16xbf16>
    %c16 = arith.constant 16 : index
    %c0_31 = arith.constant 0 : index
    %61 = vector.load %arg7[%c16, %c0_31] : memref<32x32xbf16, #tpu.memory_space<vmem>>, vector<16x32xbf16>
    %cst_32 = arith.constant dense<0.000000e+00> : vector<8x32xf32>
    %62 = tpu.matmul %60, %61, %cst_32 {dimension_numbers = #tpu.dot_dimension_numbers<[1], [0], [0], [1], [0, 0, 1, 1], [], []>} : vector<8x16xbf16>, vector<16x32xbf16>, vector<8x32xf32> -> vector<8x32xf32>
    %63 = arith.addf %37, %62 : vector<8x32xf32>
    %64 = vector.broadcast %12 : vector<1x32xf32> to vector<8x32xf32>
    %65 = arith.addf %63, %64 : vector<8x32xf32>
    %c0_33 = arith.constant 0 : index
    %c0_34 = arith.constant 0 : index
    %66 = vector.load %arg9[%c0_33, %c0_34] : memref<16x32xf32, #tpu.memory_space<vmem>>, vector<8x32xf32>
    tpu.vector_store %arg9[%c0_33, %c0_34], %65 {strides = array<i32>} : memref<16x32xf32, #tpu.memory_space<vmem>>, vector<8x32xf32>,
    %67 = vector.extract_strided_slice %7 {offsets = [8, 0], sizes = [8, 16], strides = [1, 1]} : vector<16x32xf32> to vector<8x16xf32>
    %68 = vector.extract_strided_slice %9 {offsets = [8, 0], sizes = [8, 16], strides = [1, 1]} : vector<16x32xf32> to vector<8x16xf32>
    %69 = vector.extract_strided_slice %11 {offsets = [8, 0], sizes = [8, 16], strides = [1, 1]} : vector<16x32xf32> to vector<8x16xf32>
    %70 = arith.truncf %67 : vector<8x16xf32> to vector<8x16xbf16>
    %71 = arith.truncf %68 : vector<8x16xf32> to vector<8x16xbf16>
    %cst_35 = arith.constant dense<0.000000e+00> : vector<8x8xf32>
    %72 = tpu.matmul %70, %71, %cst_35 {dimension_numbers = #tpu.dot_dimension_numbers<[1], [1], [0], [0], [0, 0, 1, 0], [], []>} : vector<8x16xbf16>, vector<8x16xbf16>, vector<8x8xf32> -> vector<8x8xf32>
    %cst_36 = arith.constant dense<0xFF800000> : vector<8xf32>
    %73 = vector.multi_reduction <maximumf>, %72, %cst_36 [1] : vector<8x8xf32> to vector<8xf32>
    %74 = vector.shape_cast %73 : vector<8xf32> to vector<8x1xf32>
    %75 = vector.broadcast %74 : vector<8x1xf32> to vector<8x8xf32>
    %76 = arith.subf %72, %75 : vector<8x8xf32>
    %77 = math.exp %76 : vector<8x8xf32>
    %cst_37 = arith.constant dense<0.000000e+00> : vector<8xf32>
    %78 = vector.multi_reduction <add>, %77, %cst_37 [1] : vector<8x8xf32> to vector<8xf32>
    %79 = vector.shape_cast %78 : vector<8xf32> to vector<8x1xf32>
    %80 = tpu.reciprocal %79 {approx = true} : vector<8x1xf32> -> vector<8x1xf32>
    %81 = vector.broadcast %80 : vector<8x1xf32> to vector<8x8xf32>
    %82 = arith.mulf %77, %81 : vector<8x8xf32>
    %c1 = arith.constant 1 : index
    %c0_38 = arith.constant 0 : index
    %c0_39 = arith.constant 0 : index
    %83 = vector.load %arg10[%c1, %c0_38, %c0_39] : memref<4x8x8xf32, #tpu.memory_space<vmem>>, vector<1x8x8xf32>
    %84 = vector.shape_cast %83 : vector<1x8x8xf32> to vector<8x8xf32>
    %85 = vector.shape_cast %82 : vector<8x8xf32> to vector<1x8x8xf32>
    tpu.vector_store %arg10[%c1, %c0_38, %c0_39], %85 {strides = array<i32>} : memref<4x8x8xf32, #tpu.memory_space<vmem>>, vector<1x8x8xf32>,
    %86 = arith.truncf %82 : vector<8x8xf32> to vector<8x8xbf16>
    %87 = arith.truncf %69 : vector<8x16xf32> to vector<8x16xbf16>
    %cst_40 = arith.constant dense<0.000000e+00> : vector<8x16xf32>
    %88 = tpu.matmul %86, %87, %cst_40 {dimension_numbers = #tpu.dot_dimension_numbers<[1], [0], [0], [1], [0, 0, 1, 1], [], []>} : vector<8x8xbf16>, vector<8x16xbf16>, vector<8x16xf32> -> vector<8x16xf32>
    %89 = arith.truncf %88 : vector<8x16xf32> to vector<8x16xbf16>
    %c0_41 = arith.constant 0 : index
    %c0_42 = arith.constant 0 : index
    %90 = vector.load %arg7[%c0_41, %c0_42] : memref<32x32xbf16, #tpu.memory_space<vmem>>, vector<16x32xbf16>
    %cst_43 = arith.constant dense<0.000000e+00> : vector<8x32xf32>
    %91 = tpu.matmul %89, %90, %cst_43 {dimension_numbers = #tpu.dot_dimension_numbers<[1], [0], [0], [1], [0, 0, 1, 1], [], []>} : vector<8x16xbf16>, vector<16x32xbf16>, vector<8x32xf32> -> vector<8x32xf32>
    %92 = vector.extract_strided_slice %7 {offsets = [8, 16], sizes = [8, 16], strides = [1, 1]} : vector<16x32xf32> to vector<8x16xf32>
    %93 = vector.extract_strided_slice %9 {offsets = [8, 16], sizes = [8, 16], strides = [1, 1]} : vector<16x32xf32> to vector<8x16xf32>
    %94 = vector.extract_strided_slice %11 {offsets = [8, 16], sizes = [8, 16], strides = [1, 1]} : vector<16x32xf32> to vector<8x16xf32>
    %95 = arith.truncf %92 : vector<8x16xf32> to vector<8x16xbf16>
    %96 = arith.truncf %93 : vector<8x16xf32> to vector<8x16xbf16>
    %cst_44 = arith.constant dense<0.000000e+00> : vector<8x8xf32>
    %97 = tpu.matmul %95, %96, %cst_44 {dimension_numbers = #tpu.dot_dimension_numbers<[1], [1], [0], [0], [0, 0, 1, 0], [], []>} : vector<8x16xbf16>, vector<8x16xbf16>, vector<8x8xf32> -> vector<8x8xf32>
    %cst_45 = arith.constant dense<0xFF800000> : vector<8xf32>
    %98 = vector.multi_reduction <maximumf>, %97, %cst_45 [1] : vector<8x8xf32> to vector<8xf32>
    %99 = vector.shape_cast %98 : vector<8xf32> to vector<8x1xf32>
    %100 = vector.broadcast %99 : vector<8x1xf32> to vector<8x8xf32>
    %101 = arith.subf %97, %100 : vector<8x8xf32>
    %102 = math.exp %101 : vector<8x8xf32>
    %cst_46 = arith.constant dense<0.000000e+00> : vector<8xf32>
    %103 = vector.multi_reduction <add>, %102, %cst_46 [1] : vector<8x8xf32> to vector<8xf32>
    %104 = vector.shape_cast %103 : vector<8xf32> to vector<8x1xf32>
    %105 = tpu.reciprocal %104 {approx = true} : vector<8x1xf32> -> vector<8x1xf32>
    %106 = vector.broadcast %105 : vector<8x1xf32> to vector<8x8xf32>
    %107 = arith.mulf %102, %106 : vector<8x8xf32>
    %c3 = arith.constant 3 : index
    %c0_47 = arith.constant 0 : index
    %c0_48 = arith.constant 0 : index
    %108 = vector.load %arg10[%c3, %c0_47, %c0_48] : memref<4x8x8xf32, #tpu.memory_space<vmem>>, vector<1x8x8xf32>
    %109 = vector.shape_cast %108 : vector<1x8x8xf32> to vector<8x8xf32>
    %110 = vector.shape_cast %107 : vector<8x8xf32> to vector<1x8x8xf32>
    tpu.vector_store %arg10[%c3, %c0_47, %c0_48], %110 {strides = array<i32>} : memref<4x8x8xf32, #tpu.memory_space<vmem>>, vector<1x8x8xf32>,
    %111 = arith.truncf %107 : vector<8x8xf32> to vector<8x8xbf16>
    %112 = arith.truncf %94 : vector<8x16xf32> to vector<8x16xbf16>
    %cst_49 = arith.constant dense<0.000000e+00> : vector<8x16xf32>
    %113 = tpu.matmul %111, %112, %cst_49 {dimension_numbers = #tpu.dot_dimension_numbers<[1], [0], [0], [1], [0, 0, 1, 1], [], []>} : vector<8x8xbf16>, vector<8x16xbf16>, vector<8x16xf32> -> vector<8x16xf32>
    %114 = arith.truncf %113 : vector<8x16xf32> to vector<8x16xbf16>
    %c16_50 = arith.constant 16 : index
    %c0_51 = arith.constant 0 : index
    %115 = vector.load %arg7[%c16_50, %c0_51] : memref<32x32xbf16, #tpu.memory_space<vmem>>, vector<16x32xbf16>
    %cst_52 = arith.constant dense<0.000000e+00> : vector<8x32xf32>
    %116 = tpu.matmul %114, %115, %cst_52 {dimension_numbers = #tpu.dot_dimension_numbers<[1], [0], [0], [1], [0, 0, 1, 1], [], []>} : vector<8x16xbf16>, vector<16x32xbf16>, vector<8x32xf32> -> vector<8x32xf32>
    %117 = arith.addf %91, %116 : vector<8x32xf32>
    %118 = vector.broadcast %12 : vector<1x32xf32> to vector<8x32xf32>
    %119 = arith.addf %117, %118 : vector<8x32xf32>
    %c8 = arith.constant 8 : index
    %c0_53 = arith.constant 0 : index
    %120 = vector.load %arg9[%c8, %c0_53] : memref<16x32xf32, #tpu.memory_space<vmem>>, vector<8x32xf32>
    tpu.vector_store %arg9[%c8, %c0_53], %119 {strides = array<i32>} : memref<16x32xf32, #tpu.memory_space<vmem>>, vector<8x32xf32>,
    return
  }
  func.func @transform_0(%arg0: i32) -> (i32, i32) {
    %c0_i32 = arith.constant 0 : i32
    %c0_i32_0 = arith.constant 0 : i32
    %c0_i32_1 = arith.constant 0 : i32
    return %c0_i32, %c0_i32_0 : i32, i32
  }
  func.func @transform_1(%arg0: i32) -> (i32, i32) {
    %c0_i32 = arith.constant 0 : i32
    %c0_i32_0 = arith.constant 0 : i32
    %c0_i32_1 = arith.constant 0 : i32
    return %c0_i32, %c0_i32_0 : i32, i32
  }
  func.func @transform_2(%arg0: i32) -> (i32, i32) {
    %c0_i32 = arith.constant 0 : i32
    %c0_i32_0 = arith.constant 0 : i32
    %c0_i32_1 = arith.constant 0 : i32
    return %c0_i32, %c0_i32_0 : i32, i32
  }
  func.func @transform_3(%arg0: i32) -> (i32, i32) {
    %c0_i32 = arith.constant 0 : i32
    %c0_i32_0 = arith.constant 0 : i32
    %c0_i32_1 = arith.constant 0 : i32
    return %c0_i32, %c0_i32_0 : i32, i32
  }
  func.func @transform_4(%arg0: i32) -> (i32, i32) {
    %c0_i32 = arith.constant 0 : i32
    %c0_i32_0 = arith.constant 0 : i32
    %c0_i32_1 = arith.constant 0 : i32
    return %c0_i32, %c0_i32_0 : i32, i32
  }
  func.func @transform_5(%arg0: i32) -> (i32, i32) {
    %c0_i32 = arith.constant 0 : i32
    %c0_i32_0 = arith.constant 0 : i32
    %c0_i32_1 = arith.constant 0 : i32
    return %c0_i32, %c0_i32_0 : i32, i32
  }
  func.func @transform_6(%arg0: i32) -> (i32, i32) {
    %c0_i32 = arith.constant 0 : i32
    %c0_i32_0 = arith.constant 0 : i32
    %c0_i32_1 = arith.constant 0 : i32
    return %c0_i32, %c0_i32_0 : i32, i32
  }
  func.func @transform_7(%arg0: i32) -> (i32, i32) {
    %c0_i32 = arith.constant 0 : i32
    %c0_i32_0 = arith.constant 0 : i32
    %c0_i32_1 = arith.constant 0 : i32
    return %c0_i32, %c0_i32_0 : i32, i32
  }
  func.func @transform_8(%arg0: i32) -> (i32, i32) {
    %c0_i32 = arith.constant 0 : i32
    %c0_i32_0 = arith.constant 0 : i32
    %c0_i32_1 = arith.constant 0 : i32
    return %c0_i32, %c0_i32_0 : i32, i32
  }
  func.func @transform_9(%arg0: i32) -> (i32, i32, i32) {
    %c0_i32 = arith.constant 0 : i32
    %c0_i32_0 = arith.constant 0 : i32
    %c0_i32_1 = arith.constant 0 : i32
    %c0_i32_2 = arith.constant 0 : i32
    return %c0_i32, %c0_i32_0, %c0_i32_1 : i32, i32, i32
  }
}

</mosaic_0001>

<llo_original>
// kernel: tpu_custom_call.1
$region0: #{tpu_custom_call.1}
  #allocation0 [shape = 'u32[]', space=smem, size = 0x4, offset = 0x4, fixed_abs, tag = 'smem constant byte address 0x4 - core index']
  #allocation1 [shape = 'u32[144,128]{1,0:T(1,128)}', space=vmem, size = 0x12000, scoped, tag = 'internal scratch']
  %s0 = inlined_call_operand.hbm [shape: f32[16,32], index: 0, kind: input, shape index: {}]
  %s1 = inlined_call_operand.hbm [shape: f32[16,24], index: 1, kind: input, shape index: {}]
  %s2 = inlined_call_operand.hbm [shape: f32[16,24], index: 2, kind: input, shape index: {}]
  %s3 = inlined_call_operand.hbm [shape: bf16[32,32], index: 3, kind: input, shape index: {}]
  %s4 = inlined_call_operand.hbm [shape: bf16[24,32], index: 4, kind: input, shape index: {}]
  %s5 = inlined_call_operand.hbm [shape: bf16[24,32], index: 5, kind: input, shape index: {}]
  %s6 = inlined_call_operand.hbm [shape: bf16[32,32], index: 6, kind: input, shape index: {}]
  %s7 = inlined_call_operand.vmem [shape: f32[1,32], index: 7, kind: input, shape index: {}]
  %s8 = inlined_call_operand.hbm [shape: f32[16,32], index: 8, kind: output, shape index: {0}]
  %s9 = inlined_call_operand.hbm [shape: f32[4,8,8], index: 9, kind: output, shape index: {1}]
  %10 = xla_tuple %s8, %s9
  %s11 = sld [smem:[#allocation0]]
  $region78: #{tpu_custom_call.1} parent=0
    _
  %s13 = ssub.s32 1, %s11
  %s14 = scalar_select 0, %s13, %s11
  $region1: #{tpu_custom_call.1} parent=0
    #allocation2 [shape = 'u8[8192]{0}', space=vmem, size = 0x2000, scoped, tag = 'input window, operand 0, single buffered']
    #allocation3 [shape = 's32[1]{0}', space=sflag, size = 0x4, scoped, tag = 'scoped memory for tpu_custom_call.1']
    #allocation4 [shape = 's32[1]{0}', space=sflag, size = 0x4, scoped, tag = 'scoped memory for tpu_custom_call.1']
    #allocation5 [shape = 'u8[8192]{0}', space=vmem, size = 0x2000, scoped, tag = 'input window, operand 1, single buffered']
    #allocation6 [shape = 's32[1]{0}', space=sflag, size = 0x4, scoped, tag = 'scoped memory for tpu_custom_call.1']
    #allocation7 [shape = 'u8[8192]{0}', space=vmem, size = 0x2000, scoped, tag = 'input window, operand 2, single buffered']
    #allocation8 [shape = 'u8[8192]{0}', space=vmem, size = 0x2000, scoped, tag = 'input window, operand 3, single buffered']
    #allocation9 [shape = 's32[1]{0}', space=sflag, size = 0x4, scoped, tag = 'scoped memory for tpu_custom_call.1']
    #allocation10 [shape = 'u8[6144]{0}', space=vmem, size = 0x1800, scoped, tag = 'input window, operand 4, single buffered']
    #allocation11 [shape = 'u8[6144]{0}', space=vmem, size = 0x1800, scoped, tag = 'input window, operand 5, single buffered']
    #allocation12 [shape = 's32[1]{0}', space=sflag, size = 0x4, scoped, tag = 'scoped memory for tpu_custom_call.1']
    #allocation13 [shape = 'u8[8192]{0}', space=vmem, size = 0x2000, scoped, tag = 'input window, operand 6, single buffered']
    #allocation14 [shape = 'u8[8192]{0}', space=vmem, size = 0x2000, scoped, tag = 'output window, operand 0, single buffered']
    #allocation15 [shape = 'u8[16384]{0}', space=vmem, size = 0x4000, scoped, tag = 'output window, operand 1, single buffered']
    #allocation16 [shape = 's32[1]{0}', space=sflag, size = 0x4, scoped, tag = 'scoped memory for tpu_custom_call.1']
    %15 = vsyncpa [#allocation3], 0
    %16 = vsyncpa [#allocation6], 0
    %17 = vsyncpa [#allocation9], 0
    %18 = vsyncpa [#allocation12], 0
    %19 = vsyncpa [#allocation4], 0
    %20 = vsyncpa [#allocation16], 0
    // Predicated region
    $region2: #{tpu_custom_call.1} parent=1 // pred_check
      _
    $region3: #{tpu_custom_call.1} parent=1 // pred_check_branch
      %22 = sbr.rel (0) target = $region5
    $region4: #{tpu_custom_call.1} parent=1 // pred_region
      %s24 = ssub.s32 256, 256
      %25 = vsyncadd [#allocation3], %s24
      %s26 = sshll.u32 [#allocation2], 4
      %s27 = int_to_ptr.vmem [resolvable:$true] %s26
      %32 = dma.hbm_to_vmem [thread:$0]  %s0, 256, %s27, [#allocation3], 128, 128, 8
    $region5: #{tpu_custom_call.1} parent=1 // pred_fallthru
      _
    // Predicated region
    $region6: #{tpu_custom_call.1} parent=1 // pred_check
      _
    $region7: #{tpu_custom_call.1} parent=1 // pred_check_branch
      %34 = sbr.rel (0) target = $region9
    $region8: #{tpu_custom_call.1} parent=1 // pred_region
      %s36 = ssub.s32 256, 256
      %37 = vsyncadd [#allocation6], %s36
      %s38 = sshll.u32 [#allocation5], 4
      %s39 = int_to_ptr.vmem [resolvable:$true] %s38
      %44 = dma.hbm_to_vmem [thread:$0]  %s1, 256, %s39, [#allocation6], 128, 128, 8
    $region9: #{tpu_custom_call.1} parent=1 // pred_fallthru
      _
    // Predicated region
    $region10: #{tpu_custom_call.1} parent=1 // pred_check
      _
    $region11: #{tpu_custom_call.1} parent=1 // pred_check_branch
      %46 = sbr.rel (0) target = $region13
    $region12: #{tpu_custom_call.1} parent=1 // pred_region
      %s48 = ssub.s32 256, 256
      %49 = vsyncadd [#allocation6], %s48
      %s50 = sshll.u32 [#allocation7], 4
      %s51 = int_to_ptr.vmem [resolvable:$true] %s50
      %56 = dma.hbm_to_vmem [thread:$0]  %s2, 256, %s51, [#allocation6], 128, 128, 8
    $region13: #{tpu_custom_call.1} parent=1 // pred_fallthru
      _
    // Predicated region
    $region14: #{tpu_custom_call.1} parent=1 // pred_check
      _
    $region15: #{tpu_custom_call.1} parent=1 // pred_check_branch
      %58 = sbr.rel (0) target = $region17
    $region16: #{tpu_custom_call.1} parent=1 // pred_region
      %s60 = ssub.s32 256, 256
      %61 = vsyncadd [#allocation9], %s60
      %s62 = sshll.u32 [#allocation8], 4
      %s63 = int_to_ptr.vmem [resolvable:$true] %s62
      %68 = dma.hbm_to_vmem [thread:$0]  %s3, 256, %s63, [#allocation9], 64, 64, 4
    $region17: #{tpu_custom_call.1} parent=1 // pred_fallthru
      _
    // Predicated region
    $region18: #{tpu_custom_call.1} parent=1 // pred_check
      _
    $region19: #{tpu_custom_call.1} parent=1 // pred_check_branch
      %70 = sbr.rel (0) target = $region21
    $region20: #{tpu_custom_call.1} parent=1 // pred_region
      %s72 = ssub.s32 192, 192
      %73 = vsyncadd [#allocation9], %s72
      %s74 = sshll.u32 [#allocation10], 4
      %s75 = int_to_ptr.vmem [resolvable:$true] %s74
      %80 = dma.hbm_to_vmem [thread:$0]  %s4, 192, %s75, [#allocation9], 64, 64, 4
    $region21: #{tpu_custom_call.1} parent=1 // pred_fallthru
      _
    // Predicated region
    $region22: #{tpu_custom_call.1} parent=1 // pred_check
      _
    $region23: #{tpu_custom_call.1} parent=1 // pred_check_branch
      %82 = sbr.rel (0) target = $region25
    $region24: #{tpu_custom_call.1} parent=1 // pred_region
      %s84 = ssub.s32 192, 192
      %85 = vsyncadd [#allocation12], %s84
      %s86 = sshll.u32 [#allocation11], 4
      %s87 = int_to_ptr.vmem [resolvable:$true] %s86
      %92 = dma.hbm_to_vmem [thread:$0]  %s5, 192, %s87, [#allocation12], 64, 64, 4
    $region25: #{tpu_custom_call.1} parent=1 // pred_fallthru
      _
    // Predicated region
    $region26: #{tpu_custom_call.1} parent=1 // pred_check
      _
    $region27: #{tpu_custom_call.1} parent=1 // pred_check_branch
      %94 = sbr.rel (0) target = $region29
    $region28: #{tpu_custom_call.1} parent=1 // pred_region
      %s96 = ssub.s32 256, 256
      %97 = vsyncadd [#allocation12], %s96
      %s98 = sshll.u32 [#allocation13], 4
      %s99 = int_to_ptr.vmem [resolvable:$true] %s98
      %104 = dma.hbm_to_vmem [thread:$0]  %s6, 256, %s99, [#allocation12], 64, 64, 4
    $region29: #{tpu_custom_call.1} parent=1 // pred_fallthru
      _
    // Predicated region
    $region30: #{tpu_custom_call.1} parent=1 // pred_check
      _
    $region31: #{tpu_custom_call.1} parent=1 // pred_check_branch
      %106 = sbr.rel (0) target = $region33
    $region32: #{tpu_custom_call.1} parent=1 // pred_region
      _
    $region33: #{tpu_custom_call.1} parent=1 // pred_fallthru
      _
    // Predicated region
    $region34: #{tpu_custom_call.1} parent=1 // pred_check
      _
    $region35: #{tpu_custom_call.1} parent=1 // pred_check_branch
      %108 = sbr.rel (0) target = $region37
    $region36: #{tpu_custom_call.1} parent=1 // pred_region
      %109 = dma.done [#allocation3], 256
    $region37: #{tpu_custom_call.1} parent=1 // pred_fallthru
      _
    // Predicated region
    $region38: #{tpu_custom_call.1} parent=1 // pred_check
      _
    $region39: #{tpu_custom_call.1} parent=1 // pred_check_branch
      %111 = sbr.rel (0) target = $region41
    $region40: #{tpu_custom_call.1} parent=1 // pred_region
      %112 = dma.done [#allocation6], 256
    $region41: #{tpu_custom_call.1} parent=1 // pred_fallthru
      _
    // Predicated region
    $region42: #{tpu_custom_call.1} parent=1 // pred_check
      _
    $region43: #{tpu_custom_call.1} parent=1 // pred_check_branch
      %114 = sbr.rel (0) target = $region45
    $region44: #{tpu_custom_call.1} parent=1 // pred_region
      %115 = dma.done [#allocation6], 256
    $region45: #{tpu_custom_call.1} parent=1 // pred_fallthru
      _
    // Predicated region
    $region46: #{tpu_custom_call.1} parent=1 // pred_check
      _
    $region47: #{tpu_custom_call.1} parent=1 // pred_check_branch
      %117 = sbr.rel (0) target = $region49
    $region48: #{tpu_custom_call.1} parent=1 // pred_region
      %118 = dma.done [#allocation9], 256
    $region49: #{tpu_custom_call.1} parent=1 // pred_fallthru
      _
    // Predicated region
    $region50: #{tpu_custom_call.1} parent=1 // pred_check
      _
    $region51: #{tpu_custom_call.1} parent=1 // pred_check_branch
      %120 = sbr.rel (0) target = $region53
    $region52: #{tpu_custom_call.1} parent=1 // pred_region
      %121 = dma.done [#allocation9], 192
    $region53: #{tpu_custom_call.1} parent=1 // pred_fallthru
      _
    // Predicated region
    $region54: #{tpu_custom_call.1} parent=1 // pred_check
      _
    $region55: #{tpu_custom_call.1} parent=1 // pred_check_branch
      %123 = sbr.rel (0) target = $region57
    $region56: #{tpu_custom_call.1} parent=1 // pred_region
      %124 = dma.done [#allocation12], 192
    $region57: #{tpu_custom_call.1} parent=1 // pred_fallthru
      _
    // Predicated region
    $region58: #{tpu_custom_call.1} parent=1 // pred_check
      _
    $region59: #{tpu_custom_call.1} parent=1 // pred_check_branch
      %126 = sbr.rel (0) target = $region61
    $region60: #{tpu_custom_call.1} parent=1 // pred_region
      %127 = dma.done [#allocation12], 256
    $region61: #{tpu_custom_call.1} parent=1 // pred_fallthru
      _
    %v129 = vld [vmem:[#allocation2] sm:$0xff]
    %v130 = vld [vmem:[#allocation2 + $0x8] sm:$0xff]
    %v131 = vpack.c.bf16 %v130, %v129
    %v132 = vld [vmem:[#allocation5] sm:$0xff]
    %v133 = vld [vmem:[#allocation5 + $0x8] sm:$0xff]
    %v134 = vpack.c.bf16 %v133, %v132
    %v135 = vld [vmem:[#allocation7] sm:$0xff]
    %v136 = vld [vmem:[#allocation7 + $0x8] sm:$0xff]
    %v137 = vpack.c.bf16 %v136, %v135
    %v138 = vld [vmem:[#allocation8] sm:$0xf]
    %v139 = vld [vmem:[#allocation8 + $0x4] sm:$0xf]
    %v140 = vld [vmem:[#allocation8 + $0x8] sm:$0xf]
    %v141 = vld [vmem:[#allocation8 + $0xc] sm:$0xf]
    %v146 = vunpack.c.l.b16 %v138
    %v147 = vunpack.c.l.b16 %v139
    %v148 = vunpack.c.l.b16 %v140
    %v149 = vunpack.c.l.b16 %v141
    %v150 = vpack.c.b16 %v147, %v146
    %v151 = vpack.c.b16 %v149, %v148
    %vm154 = vcmask 261120
    %v156 = vsel %vm154, %v131, 0
    %158 = vmatprep.subr.bf16.mxu0 0
    %159 = vmatpush1.bf16.msra.mxu0 0
    %160 = vmatprep.subr.bf16.mxu0 0
    %161 = vmatpush1.bf16.msra.mxu0 0
    %162 = vmatprep.subr.bf16.mxu0 0
    %163 = vmatpush1.bf16.msra.mxu0 0
    %164 = vmatprep.subr.bf16.mxu0 0
    %165 = vmatpush1.bf16.msra.mxu0 0
    %166 = vmatprep.subr.bf16.mxu0 0
    %167 = vmatpush1.bf16.msra.mxu0 0
    %168 = vmatprep.subr.bf16.mxu0 0
    %169 = vmatpush1.bf16.msra.mxu0 0
    %170 = vmatprep.subr.bf16.mxu0 0
    %171 = vmatpush1.bf16.msra.mxu0 %v151
    %172 = vmatprep.subr.bf16.mxu0 0
    %173 = vmatpush1.bf16.msra.mxu0 %v150
    %174 = vmatprep.subr.bf16.mxu0 0
    %175 = vmatpush2.bf16.msra.mxu0 0
    %176 = vmatprep.subr.bf16.mxu0 0
    %177 = vmatpush2.bf16.msra.mxu0 0
    %178 = vmatprep.subr.bf16.mxu0 0
    %179 = vmatpush2.bf16.msra.mxu0 0
    %180 = vmatprep.subr.bf16.mxu0 0
    %181 = vmatpush2.bf16.msra.mxu0 0
    %182 = vmatprep.subr.bf16.mxu0 0
    %183 = vmatpush2.bf16.msra.mxu0 0
    %184 = vmatprep.subr.bf16.mxu0 0
    %185 = vmatpush2.bf16.msra.mxu0 0
    %186 = vmatprep.subr.bf16.mxu0 0
    %187 = vmatpush2.bf16.msra.mxu0 0
    %188 = vmatprep.subr.bf16.mxu0 0
    %189 = vmatpush2.bf16.msra.mxu0 0
    %190 = vmatprep.mubr.bf16.mxu0 0
    %191 = vmatmul.mubr.bf16.gmra.mxu0 %v156
    %v192 = vpop.f32.mrf.mxu0
    %v193 = vadd.f32 0.0, %v192
    %v194 = vpop.f32.mrf.mxu0
    %v195 = vpop.f32.mrf.mxu0
    %v196 = vadd.f32 0.0, %v195
    %v197 = vpop.f32.mrf.mxu0
    %198 = vdwg.mxu0
    %v199 = vld [vmem:[#allocation10] sm:$0xf]
    %v200 = vld [vmem:[#allocation10 + $0x4] sm:$0xf]
    %v201 = vld [vmem:[#allocation10 + $0x8] sm:$0xf]
    %v205 = vunpack.c.l.b16 %v199
    %v206 = vunpack.c.l.b16 %v200
    %v207 = vunpack.c.l.b16 %v201
    %v208 = vpack.c.b16 %v206, %v205
    %v209 = vpack.c.b16 %v207, %v207
    %vm211 = vcmask 195584
    %v213 = vsel %vm211, %v134, 0
    %vm215 = vcmask 1043456
    %v217 = vsel %vm215, %v209, 0
    %219 = vmatprep.subr.bf16.mxu0 0
    %220 = vmatpush1.bf16.msra.mxu0 0
    %221 = vmatprep.subr.bf16.mxu0 0
    %222 = vmatpush1.bf16.msra.mxu0 0
    %223 = vmatprep.subr.bf16.mxu0 0
    %224 = vmatpush1.bf16.msra.mxu0 0
    %225 = vmatprep.subr.bf16.mxu0 0
    %226 = vmatpush1.bf16.msra.mxu0 0
    %227 = vmatprep.subr.bf16.mxu0 0
    %228 = vmatpush1.bf16.msra.mxu0 0
    %229 = vmatprep.subr.bf16.mxu0 0
    %230 = vmatpush1.bf16.msra.mxu0 0
    %231 = vmatprep.subr.bf16.mxu0 0
    %232 = vmatpush1.bf16.msra.mxu0 %v217
    %233 = vmatprep.subr.bf16.mxu0 0
    %234 = vmatpush1.bf16.msra.mxu0 %v208
    %235 = vmatprep.subr.bf16.mxu0 0
    %236 = vmatpush2.bf16.msra.mxu0 0
    %237 = vmatprep.subr.bf16.mxu0 0
    %238 = vmatpush2.bf16.msra.mxu0 0
    %239 = vmatprep.subr.bf16.mxu0 0
    %240 = vmatpush2.bf16.msra.mxu0 0
    %241 = vmatprep.subr.bf16.mxu0 0
    %242 = vmatpush2.bf16.msra.mxu0 0
    %243 = vmatprep.subr.bf16.mxu0 0
    %244 = vmatpush2.bf16.msra.mxu0 0
    %245 = vmatprep.subr.bf16.mxu0 0
    %246 = vmatpush2.bf16.msra.mxu0 0
    %247 = vmatprep.subr.bf16.mxu0 0
    %248 = vmatpush2.bf16.msra.mxu0 0
    %249 = vmatprep.subr.bf16.mxu0 0
    %250 = vmatpush2.bf16.msra.mxu0 0
    %251 = vmatprep.mubr.bf16.mxu0 0
    %252 = vmatmul.mubr.bf16.gmra.mxu0 %v213
    %v253 = vpop.f32.mrf.mxu0
    %v254 = vadd.f32 0.0, %v253
    %v255 = vpop.f32.mrf.mxu0
    %v256 = vpop.f32.mrf.mxu0
    %v257 = vadd.f32 0.0, %v256
    %v258 = vpop.f32.mrf.mxu0
    %259 = vdwg.mxu0
    %v260 = vld [vmem:[#allocation11] sm:$0xf]
    %v261 = vld [vmem:[#allocation11 + $0x4] sm:$0xf]
    %v262 = vld [vmem:[#allocation11 + $0x8] sm:$0xf]
    %v266 = vunpack.c.l.b16 %v260
    %v267 = vunpack.c.l.b16 %v261
    %v268 = vunpack.c.l.b16 %v262
    %v269 = vpack.c.b16 %v267, %v266
    %v270 = vpack.c.b16 %v268, %v268
    %v273 = vsel %vm211, %v137, 0
    %v276 = vsel %vm215, %v270, 0
    %278 = vmatprep.subr.bf16.mxu0 0
    %279 = vmatpush1.bf16.msra.mxu0 0
    %280 = vmatprep.subr.bf16.mxu0 0
    %281 = vmatpush1.bf16.msra.mxu0 0
    %282 = vmatprep.subr.bf16.mxu0 0
    %283 = vmatpush1.bf16.msra.mxu0 0
    %284 = vmatprep.subr.bf16.mxu0 0
    %285 = vmatpush1.bf16.msra.mxu0 0
    %286 = vmatprep.subr.bf16.mxu0 0
    %287 = vmatpush1.bf16.msra.mxu0 0
    %288 = vmatprep.subr.bf16.mxu0 0
    %289 = vmatpush1.bf16.msra.mxu0 0
    %290 = vmatprep.subr.bf16.mxu0 0
    %291 = vmatpush1.bf16.msra.mxu0 %v276
    %292 = vmatprep.subr.bf16.mxu0 0
    %293 = vmatpush1.bf16.msra.mxu0 %v269
    %294 = vmatprep.subr.bf16.mxu0 0
    %295 = vmatpush2.bf16.msra.mxu0 0
    %296 = vmatprep.subr.bf16.mxu0 0
    %297 = vmatpush2.bf16.msra.mxu0 0
    %298 = vmatprep.subr.bf16.mxu0 0
    %299 = vmatpush2.bf16.msra.mxu0 0
    %300 = vmatprep.subr.bf16.mxu0 0
    %301 = vmatpush2.bf16.msra.mxu0 0
    %302 = vmatprep.subr.bf16.mxu0 0
    %303 = vmatpush2.bf16.msra.mxu0 0
    %304 = vmatprep.subr.bf16.mxu0 0
    %305 = vmatpush2.bf16.msra.mxu0 0
    %306 = vmatprep.subr.bf16.mxu0 0
    %307 = vmatpush2.bf16.msra.mxu0 0
    %308 = vmatprep.subr.bf16.mxu0 0
    %309 = vmatpush2.bf16.msra.mxu0 0
    %310 = vmatprep.mubr.bf16.mxu0 0
    %311 = vmatmul.mubr.bf16.gmra.mxu0 %v273
    %v312 = vpop.f32.mrf.mxu0
    %v313 = vadd.f32 0.0, %v312
    %v314 = vpop.f32.mrf.mxu0
    %v315 = vpop.f32.mrf.mxu0
    %v316 = vadd.f32 0.0, %v315
    %v317 = vpop.f32.mrf.mxu0
    %318 = vdwg.mxu0
    %v319 = vld [vmem:[%s7] sm:$0x1]
    %v320 = vpack.c.bf16 %v193, %v193
    %v321 = vpack.c.bf16 %v254, %v254
    %vm322 = vcmask 130048
    %v324 = vsel %vm322, %v320, 0
    %v327 = vsel %vm322, %v321, 0
    %329 = vmatprep.subr.bf16.mxu0 0
    %330 = vmatpush1.bf16.xpose.msra.mxu0 0
    %331 = vmatprep.subr.bf16.mxu0 0
    %332 = vmatpush1.bf16.xpose.msra.mxu0 0
    %333 = vmatprep.subr.bf16.mxu0 0
    %334 = vmatpush1.bf16.xpose.msra.mxu0 0
    %335 = vmatprep.subr.bf16.mxu0 0
    %336 = vmatpush1.bf16.xpose.msra.mxu0 0
    %337 = vmatprep.subr.bf16.mxu0 0
    %338 = vmatpush1.bf16.xpose.msra.mxu0 0
    %339 = vmatprep.subr.bf16.mxu0 0
    %340 = vmatpush1.bf16.xpose.msra.mxu0 0
    %341 = vmatprep.subr.bf16.mxu0 0
    %342 = vmatpush1.bf16.xpose.msra.mxu0 0
    %343 = vmatprep.subr.bf16.mxu0 0
    %344 = vmatpush1.bf16.xpose.msra.mxu0 %v327
    %345 = vmatprep.subr.bf16.mxu0 0
    %346 = vmatpush2.bf16.xpose.msra.mxu0 0
    %347 = vmatprep.subr.bf16.mxu0 0
    %348 = vmatpush2.bf16.xpose.msra.mxu0 0
    %349 = vmatprep.subr.bf16.mxu0 0
    %350 = vmatpush2.bf16.xpose.msra.mxu0 0
    %351 = vmatprep.subr.bf16.mxu0 0
    %352 = vmatpush2.bf16.xpose.msra.mxu0 0
    %353 = vmatprep.subr.bf16.mxu0 0
    %354 = vmatpush2.bf16.xpose.msra.mxu0 0
    %355 = vmatprep.subr.bf16.mxu0 0
    %356 = vmatpush2.bf16.xpose.msra.mxu0 0
    %357 = vmatprep.subr.bf16.mxu0 0
    %358 = vmatpush2.bf16.xpose.msra.mxu0 0
    %359 = vmatprep.subr.bf16.mxu0 0
    %360 = vmatpush2.bf16.xpose.msra.mxu0 0
    %361 = vmatprep.mubr.bf16.mxu0 0
    %362 = vmatmul.mubr.bf16.gmra.mxu0 %v324
    %v363 = vpop.f32.mrf.mxu0
    %v364 = vadd.f32 0.0, %v363
    %v365 = vpop.f32.mrf.mxu0
    %v366 = vpop.f32.mrf.mxu0
    %v367 = vpop.f32.mrf.mxu0
    %368 = vdwg.mxu0
    %vm369 = vcmask 64512
    %v370 = vsel %vm369, %v364, -inf
    %371 = vmax.xlane.f32.xlu0 %v370
    %v372 = vpop.xlane.xlu0 %371
    %v373 = vsub.f32 %v364, %v372
    %v374 = vmul.f32 %v373, 1.442695
    %v375 = vpow.pop %v374
    %v376 = vsel %vm369, %v375, 0.0
    %377 = vadd.xlane.f32.xlu0 %v376
    %v378 = vpop.xlane.xlu0 %377
    %v379 = vrcp.pop %v378
    %v380 = vmul.f32 %v375, %v379
    %381 = vst.msk [vmem:[#allocation15] sm:$0xff] %vm369, %v380
    %v382 = vpack.c.bf16 %v380, %v380
    %v383 = vpack.c.bf16 %v313, %v313
    %v385 = vsel %vm369, %v382, 0
    %v388 = vsel %vm215, %v383, 0
    %390 = vmatprep.subr.bf16.mxu0 0
    %391 = vmatpush1.bf16.msra.mxu0 0
    %392 = vmatprep.subr.bf16.mxu0 0
    %393 = vmatpush1.bf16.msra.mxu0 0
    %394 = vmatprep.subr.bf16.mxu0 0
    %395 = vmatpush1.bf16.msra.mxu0 0
    %396 = vmatprep.subr.bf16.mxu0 0
    %397 = vmatpush1.bf16.msra.mxu0 0
    %398 = vmatprep.subr.bf16.mxu0 0
    %399 = vmatpush1.bf16.msra.mxu0 0
    %400 = vmatprep.subr.bf16.mxu0 0
    %401 = vmatpush1.bf16.msra.mxu0 0
    %402 = vmatprep.subr.bf16.mxu0 0
    %403 = vmatpush1.bf16.msra.mxu0 0
    %404 = vmatprep.subr.bf16.mxu0 0
    %405 = vmatpush1.bf16.msra.mxu0 %v388
    %406 = vmatprep.subr.bf16.mxu0 0
    %407 = vmatpush2.bf16.msra.mxu0 0
    %408 = vmatprep.subr.bf16.mxu0 0
    %409 = vmatpush2.bf16.msra.mxu0 0
    %410 = vmatprep.subr.bf16.mxu0 0
    %411 = vmatpush2.bf16.msra.mxu0 0
    %412 = vmatprep.subr.bf16.mxu0 0
    %413 = vmatpush2.bf16.msra.mxu0 0
    %414 = vmatprep.subr.bf16.mxu0 0
    %415 = vmatpush2.bf16.msra.mxu0 0
    %416 = vmatprep.subr.bf16.mxu0 0
    %417 = vmatpush2.bf16.msra.mxu0 0
    %418 = vmatprep.subr.bf16.mxu0 0
    %419 = vmatpush2.bf16.msra.mxu0 0
    %420 = vmatprep.subr.bf16.mxu0 0
    %421 = vmatpush2.bf16.msra.mxu0 0
    %422 = vmatprep.mubr.bf16.mxu0 0
    %423 = vmatmul.mubr.bf16.gmra.mxu0 %v385
    %v424 = vpop.f32.mrf.mxu0
    %v425 = vadd.f32 0.0, %v424
    %v426 = vpop.f32.mrf.mxu0
    %v427 = vpop.f32.mrf.mxu0
    %v428 = vpop.f32.mrf.mxu0
    %429 = vdwg.mxu0
    %v430 = vpack.c.bf16 %v425, %v425
    %v431 = vld [vmem:[#allocation13] sm:$0xf]
    %v432 = vld [vmem:[#allocation13 + $0x4] sm:$0xf]
    %434 = vrot.lane.b32.xlu0 %v320, 112
    %v435 = vpop.permute.xlu0 %434
    %437 = vrot.lane.b32.xlu0 %v321, 112
    %v438 = vpop.permute.xlu0 %437
    %v440 = vsel %vm322, %v435, 0
    %v443 = vsel %vm322, %v438, 0
    %445 = vmatprep.subr.bf16.mxu0 0
    %446 = vmatpush1.bf16.xpose.msra.mxu0 0
    %447 = vmatprep.subr.bf16.mxu0 0
    %448 = vmatpush1.bf16.xpose.msra.mxu0 0
    %449 = vmatprep.subr.bf16.mxu0 0
    %450 = vmatpush1.bf16.xpose.msra.mxu0 0
    %451 = vmatprep.subr.bf16.mxu0 0
    %452 = vmatpush1.bf16.xpose.msra.mxu0 0
    %453 = vmatprep.subr.bf16.mxu0 0
    %454 = vmatpush1.bf16.xpose.msra.mxu0 0
    %455 = vmatprep.subr.bf16.mxu0 0
    %456 = vmatpush1.bf16.xpose.msra.mxu0 0
    %457 = vmatprep.subr.bf16.mxu0 0
    %458 = vmatpush1.bf16.xpose.msra.mxu0 0
    %459 = vmatprep.subr.bf16.mxu0 0
    %460 = vmatpush1.bf16.xpose.msra.mxu0 %v443
    %461 = vmatprep.subr.bf16.mxu0 0
    %462 = vmatpush2.bf16.xpose.msra.mxu0 0
    %463 = vmatprep.subr.bf16.mxu0 0
    %464 = vmatpush2.bf16.xpose.msra.mxu0 0
    %465 = vmatprep.subr.bf16.mxu0 0
    %466 = vmatpush2.bf16.xpose.msra.mxu0 0
    %467 = vmatprep.subr.bf16.mxu0 0
    %468 = vmatpush2.bf16.xpose.msra.mxu0 0
    %469 = vmatprep.subr.bf16.mxu0 0
    %470 = vmatpush2.bf16.xpose.msra.mxu0 0
    %471 = vmatprep.subr.bf16.mxu0 0
    %472 = vmatpush2.bf16.xpose.msra.mxu0 0
    %473 = vmatprep.subr.bf16.mxu0 0
    %474 = vmatpush2.bf16.xpose.msra.mxu0 0
    %475 = vmatprep.subr.bf16.mxu0 0
    %476 = vmatpush2.bf16.xpose.msra.mxu0 0
    %477 = vmatprep.mubr.bf16.mxu0 0
    %478 = vmatmul.mubr.bf16.gmra.mxu0 %v440
    %v479 = vpop.f32.mrf.mxu0
    %v480 = vadd.f32 0.0, %v479
    %v481 = vpop.f32.mrf.mxu0
    %v482 = vpop.f32.mrf.mxu0
    %v483 = vpop.f32.mrf.mxu0
    %484 = vdwg.mxu0
    %v485 = vsel %vm369, %v480, -inf
    %486 = vmax.xlane.f32.xlu0 %v485
    %v487 = vpop.xlane.xlu0 %486
    %v488 = vsub.f32 %v480, %v487
    %v489 = vmul.f32 %v488, 1.442695
    %v490 = vpow.pop %v489
    %v491 = vsel %vm369, %v490, 0.0
    %492 = vadd.xlane.f32.xlu0 %v491
    %v493 = vpop.xlane.xlu0 %492
    %v494 = vrcp.pop %v493
    %v495 = vmul.f32 %v490, %v494
    %s496 = scalar_lea.vmem [#allocation15], 16
    %497 = vst.msk [vmem:[%s496] sm:$0xff] %vm369, %v495
    %v498 = vpack.c.bf16 %v495, %v495
    %500 = vrot.lane.b32.xlu0 %v383, 112
    %v501 = vpop.permute.xlu0 %500
    %v503 = vsel %vm369, %v498, 0
    %v506 = vsel %vm215, %v501, 0
    %508 = vmatprep.subr.bf16.mxu0 0
    %509 = vmatpush1.bf16.msra.mxu0 0
    %510 = vmatprep.subr.bf16.mxu0 0
    %511 = vmatpush1.bf16.msra.mxu0 0
    %512 = vmatprep.subr.bf16.mxu0 0
    %513 = vmatpush1.bf16.msra.mxu0 0
    %514 = vmatprep.subr.bf16.mxu0 0
    %515 = vmatpush1.bf16.msra.mxu0 0
    %516 = vmatprep.subr.bf16.mxu0 0
    %517 = vmatpush1.bf16.msra.mxu0 0
    %518 = vmatprep.subr.bf16.mxu0 0
    %519 = vmatpush1.bf16.msra.mxu0 0
    %520 = vmatprep.subr.bf16.mxu0 0
    %521 = vmatpush1.bf16.msra.mxu0 0
    %522 = vmatprep.subr.bf16.mxu0 0
    %523 = vmatpush1.bf16.msra.mxu0 %v506
    %524 = vmatprep.subr.bf16.mxu0 0
    %525 = vmatpush2.bf16.msra.mxu0 0
    %526 = vmatprep.subr.bf16.mxu0 0
    %527 = vmatpush2.bf16.msra.mxu0 0
    %528 = vmatprep.subr.bf16.mxu0 0
    %529 = vmatpush2.bf16.msra.mxu0 0
    %530 = vmatprep.subr.bf16.mxu0 0
    %531 = vmatpush2.bf16.msra.mxu0 0
    %532 = vmatprep.subr.bf16.mxu0 0
    %533 = vmatpush2.bf16.msra.mxu0 0
    %534 = vmatprep.subr.bf16.mxu0 0
    %535 = vmatpush2.bf16.msra.mxu0 0
    %536 = vmatprep.subr.bf16.mxu0 0
    %537 = vmatpush2.bf16.msra.mxu0 0
    %538 = vmatprep.subr.bf16.mxu0 0
    %539 = vmatpush2.bf16.msra.mxu0 0
    %540 = vmatprep.mubr.bf16.mxu0 0
    %541 = vmatmul.mubr.bf16.gmra.mxu0 %v503
    %v542 = vpop.f32.mrf.mxu0
    %v543 = vadd.f32 0.0, %v542
    %v544 = vpop.f32.mrf.mxu0
    %v545 = vpop.f32.mrf.mxu0
    %v546 = vpop.f32.mrf.mxu0
    %547 = vdwg.mxu0
    %v548 = vpack.c.bf16 %v543, %v543
    %v549 = vld [vmem:[#allocation13 + $0x8] sm:$0xf]
    %v550 = vld [vmem:[#allocation13 + $0xc] sm:$0xf]
    %v553 = vunpack.c.l.b16 %v549
    %v554 = vunpack.c.l.b16 %v550
    %v555 = vpack.c.b16 %v554, %v553
    %v558 = vsel %vm322, %v548, 0
    %560 = vmatprep.subr.bf16.mxu0 0
    %561 = vmatpush1.bf16.msra.mxu0 0
    %562 = vmatprep.subr.bf16.mxu0 0
    %563 = vmatpush1.bf16.msra.mxu0 0
    %564 = vmatprep.subr.bf16.mxu0 0
    %565 = vmatpush1.bf16.msra.mxu0 0
    %566 = vmatprep.subr.bf16.mxu0 0
    %567 = vmatpush1.bf16.msra.mxu0 0
    %568 = vmatprep.subr.bf16.mxu0 0
    %569 = vmatpush1.bf16.msra.mxu0 0
    %570 = vmatprep.subr.bf16.mxu0 0
    %571 = vmatpush1.bf16.msra.mxu0 0
    %572 = vmatprep.subr.bf16.mxu0 0
    %573 = vmatpush1.bf16.msra.mxu0 0
    %574 = vmatprep.subr.bf16.mxu0 0
    %575 = vmatpush1.bf16.msra.mxu0 %v555
    %576 = vmatprep.subr.bf16.mxu0 0
    %577 = vmatpush2.bf16.msra.mxu0 0
    %578 = vmatprep.subr.bf16.mxu0 0
    %579 = vmatpush2.bf16.msra.mxu0 0
    %580 = vmatprep.subr.bf16.mxu0 0
    %581 = vmatpush2.bf16.msra.mxu0 0
    %582 = vmatprep.subr.bf16.mxu0 0
    %583 = vmatpush2.bf16.msra.mxu0 0
    %584 = vmatprep.subr.bf16.mxu0 0
    %585 = vmatpush2.bf16.msra.mxu0 0
    %586 = vmatprep.subr.bf16.mxu0 0
    %587 = vmatpush2.bf16.msra.mxu0 0
    %588 = vmatprep.subr.bf16.mxu0 0
    %589 = vmatpush2.bf16.msra.mxu0 0
    %590 = vmatprep.subr.bf16.mxu0 0
    %591 = vmatpush2.bf16.msra.mxu0 0
    %592 = vmatprep.mubr.bf16.mxu0 0
    %593 = vmatmul.mubr.bf16.gmra.mxu0 %v558
    %v594 = vpop.f32.mrf.mxu0
    %v595 = vadd.f32 0.0, %v594
    %v596 = vpop.f32.mrf.mxu0
    %v597 = vpop.f32.mrf.mxu0
    %v598 = vpop.f32.mrf.mxu0
    %599 = vdwg.mxu0
    %v602 = vunpack.c.l.b16 %v431
    %v603 = vunpack.c.l.b16 %v432
    %v604 = vpack.c.b16 %v603, %v602
    %v607 = vsel %vm322, %v430, 0
    %609 = vmatprep.subr.bf16.mxu0 0
    %610 = vmatpush1.bf16.msra.mxu0 0
    %611 = vmatprep.subr.bf16.mxu0 0
    %612 = vmatpush1.bf16.msra.mxu0 0
    %613 = vmatprep.subr.bf16.mxu0 0
    %614 = vmatpush1.bf16.msra.mxu0 0
    %615 = vmatprep.subr.bf16.mxu0 0
    %616 = vmatpush1.bf16.msra.mxu0 0
    %617 = vmatprep.subr.bf16.mxu0 0
    %618 = vmatpush1.bf16.msra.mxu0 0
    %619 = vmatprep.subr.bf16.mxu0 0
    %620 = vmatpush1.bf16.msra.mxu0 0
    %621 = vmatprep.subr.bf16.mxu0 0
    %622 = vmatpush1.bf16.msra.mxu0 0
    %623 = vmatprep.subr.bf16.mxu0 0
    %624 = vmatpush1.bf16.msra.mxu0 %v604
    %625 = vmatprep.subr.bf16.mxu0 0
    %626 = vmatpush2.bf16.msra.mxu0 0
    %627 = vmatprep.subr.bf16.mxu0 0
    %628 = vmatpush2.bf16.msra.mxu0 0
    %629 = vmatprep.subr.bf16.mxu0 0
    %630 = vmatpush2.bf16.msra.mxu0 0
    %631 = vmatprep.subr.bf16.mxu0 0
    %632 = vmatpush2.bf16.msra.mxu0 0
    %633 = vmatprep.subr.bf16.mxu0 0
    %634 = vmatpush2.bf16.msra.mxu0 0
    %635 = vmatprep.subr.bf16.mxu0 0
    %636 = vmatpush2.bf16.msra.mxu0 0
    %637 = vmatprep.subr.bf16.mxu0 0
    %638 = vmatpush2.bf16.msra.mxu0 0
    %639 = vmatprep.subr.bf16.mxu0 0
    %640 = vmatpush2.bf16.msra.mxu0 0
    %641 = vmatprep.mubr.bf16.mxu0 0
    %642 = vmatmul.mubr.bf16.gmra.mxu0 %v607
    %v643 = vpop.f32.mrf.mxu0
    %v644 = vadd.f32 %v595, %v643
    %v645 = vpop.f32.mrf.mxu0
    %v646 = vpop.f32.mrf.mxu0
    %v647 = vpop.f32.mrf.mxu0
    %648 = vdwg.mxu0
    %v650 = vlaneseq
    %v651 = vshrl.u32 %v650, 7
    %v652 = vsub.s32 0, %v651
    %v653 = vrot.slane %v319, %v652
    %v655 = vadd.f32 %v644, %v653
    %656 = vst.msk [vmem:[#allocation14] sm:$0xff] %vm154, %v655
    %v657 = vpack.c.bf16 %v196, %v196
    %v658 = vpack.c.bf16 %v257, %v257
    %v660 = vsel %vm322, %v657, 0
    %v663 = vsel %vm322, %v658, 0
    %665 = vmatprep.subr.bf16.mxu0 0
    %666 = vmatpush1.bf16.xpose.msra.mxu0 0
    %667 = vmatprep.subr.bf16.mxu0 0
    %668 = vmatpush1.bf16.xpose.msra.mxu0 0
    %669 = vmatprep.subr.bf16.mxu0 0
    %670 = vmatpush1.bf16.xpose.msra.mxu0 0
    %671 = vmatprep.subr.bf16.mxu0 0
    %672 = vmatpush1.bf16.xpose.msra.mxu0 0
    %673 = vmatprep.subr.bf16.mxu0 0
    %674 = vmatpush1.bf16.xpose.msra.mxu0 0
    %675 = vmatprep.subr.bf16.mxu0 0
    %676 = vmatpush1.bf16.xpose.msra.mxu0 0
    %677 = vmatprep.subr.bf16.mxu0 0
    %678 = vmatpush1.bf16.xpose.msra.mxu0 0
    %679 = vmatprep.subr.bf16.mxu0 0
    %680 = vmatpush1.bf16.xpose.msra.mxu0 %v663
    %681 = vmatprep.subr.bf16.mxu0 0
    %682 = vmatpush2.bf16.xpose.msra.mxu0 0
    %683 = vmatprep.subr.bf16.mxu0 0
    %684 = vmatpush2.bf16.xpose.msra.mxu0 0
    %685 = vmatprep.subr.bf16.mxu0 0
    %686 = vmatpush2.bf16.xpose.msra.mxu0 0
    %687 = vmatprep.subr.bf16.mxu0 0
    %688 = vmatpush2.bf16.xpose.msra.mxu0 0
    %689 = vmatprep.subr.bf16.mxu0 0
    %690 = vmatpush2.bf16.xpose.msra.mxu0 0
    %691 = vmatprep.subr.bf16.mxu0 0
    %692 = vmatpush2.bf16.xpose.msra.mxu0 0
    %693 = vmatprep.subr.bf16.mxu0 0
    %694 = vmatpush2.bf16.xpose.msra.mxu0 0
    %695 = vmatprep.subr.bf16.mxu0 0
    %696 = vmatpush2.bf16.xpose.msra.mxu0 0
    %697 = vmatprep.mubr.bf16.mxu0 0
    %698 = vmatmul.mubr.bf16.gmra.mxu0 %v660
    %v699 = vpop.f32.mrf.mxu0
    %v700 = vadd.f32 0.0, %v699
    %v701 = vpop.f32.mrf.mxu0
    %v702 = vpop.f32.mrf.mxu0
    %v703 = vpop.f32.mrf.mxu0
    %704 = vdwg.mxu0
    %v705 = vsel %vm369, %v700, -inf
    %706 = vmax.xlane.f32.xlu0 %v705
    %v707 = vpop.xlane.xlu0 %706
    %v708 = vsub.f32 %v700, %v707
    %v709 = vmul.f32 %v708, 1.442695
    %v710 = vpow.pop %v709
    %v711 = vsel %vm369, %v710, 0.0
    %712 = vadd.xlane.f32.xlu0 %v711
    %v713 = vpop.xlane.xlu0 %712
    %v714 = vrcp.pop %v713
    %v715 = vmul.f32 %v710, %v714
    %s716 = scalar_lea.vmem [#allocation15], 8
    %717 = vst.msk [vmem:[%s716] sm:$0xff] %vm369, %v715
    %v718 = vpack.c.bf16 %v715, %v715
    %v719 = vpack.c.bf16 %v316, %v316
    %v721 = vsel %vm369, %v718, 0
    %v724 = vsel %vm215, %v719, 0
    %726 = vmatprep.subr.bf16.mxu0 0
    %727 = vmatpush1.bf16.msra.mxu0 0
    %728 = vmatprep.subr.bf16.mxu0 0
    %729 = vmatpush1.bf16.msra.mxu0 0
    %730 = vmatprep.subr.bf16.mxu0 0
    %731 = vmatpush1.bf16.msra.mxu0 0
    %732 = vmatprep.subr.bf16.mxu0 0
    %733 = vmatpush1.bf16.msra.mxu0 0
    %734 = vmatprep.subr.bf16.mxu0 0
    %735 = vmatpush1.bf16.msra.mxu0 0
    %736 = vmatprep.subr.bf16.mxu0 0
    %737 = vmatpush1.bf16.msra.mxu0 0
    %738 = vmatprep.subr.bf16.mxu0 0
    %739 = vmatpush1.bf16.msra.mxu0 0
    %740 = vmatprep.subr.bf16.mxu0 0
    %741 = vmatpush1.bf16.msra.mxu0 %v724
    %742 = vmatprep.subr.bf16.mxu0 0
    %743 = vmatpush2.bf16.msra.mxu0 0
    %744 = vmatprep.subr.bf16.mxu0 0
    %745 = vmatpush2.bf16.msra.mxu0 0
    %746 = vmatprep.subr.bf16.mxu0 0
    %747 = vmatpush2.bf16.msra.mxu0 0
    %748 = vmatprep.subr.bf16.mxu0 0
    %749 = vmatpush2.bf16.msra.mxu0 0
    %750 = vmatprep.subr.bf16.mxu0 0
    %751 = vmatpush2.bf16.msra.mxu0 0
    %752 = vmatprep.subr.bf16.mxu0 0
    %753 = vmatpush2.bf16.msra.mxu0 0
    %754 = vmatprep.subr.bf16.mxu0 0
    %755 = vmatpush2.bf16.msra.mxu0 0
    %756 = vmatprep.subr.bf16.mxu0 0
    %757 = vmatpush2.bf16.msra.mxu0 0
    %758 = vmatprep.mubr.bf16.mxu0 0
    %759 = vmatmul.mubr.bf16.gmra.mxu0 %v721
    %v760 = vpop.f32.mrf.mxu0
    %v761 = vadd.f32 0.0, %v760
    %v762 = vpop.f32.mrf.mxu0
    %v763 = vpop.f32.mrf.mxu0
    %v764 = vpop.f32.mrf.mxu0
    %765 = vdwg.mxu0
    %v766 = vpack.c.bf16 %v761, %v761
    %v767 = vld [vmem:[#allocation13] sm:$0xf]
    %v768 = vld [vmem:[#allocation13 + $0x4] sm:$0xf]
    %770 = vrot.lane.b32.xlu0 %v657, 112
    %v771 = vpop.permute.xlu0 %770
    %773 = vrot.lane.b32.xlu0 %v658, 112
    %v774 = vpop.permute.xlu0 %773
    %v776 = vsel %vm322, %v771, 0
    %v779 = vsel %vm322, %v774, 0
    %781 = vmatprep.subr.bf16.mxu0 0
    %782 = vmatpush1.bf16.xpose.msra.mxu0 0
    %783 = vmatprep.subr.bf16.mxu0 0
    %784 = vmatpush1.bf16.xpose.msra.mxu0 0
    %785 = vmatprep.subr.bf16.mxu0 0
    %786 = vmatpush1.bf16.xpose.msra.mxu0 0
    %787 = vmatprep.subr.bf16.mxu0 0
    %788 = vmatpush1.bf16.xpose.msra.mxu0 0
    %789 = vmatprep.subr.bf16.mxu0 0
    %790 = vmatpush1.bf16.xpose.msra.mxu0 0
    %791 = vmatprep.subr.bf16.mxu0 0
    %792 = vmatpush1.bf16.xpose.msra.mxu0 0
    %793 = vmatprep.subr.bf16.mxu0 0
    %794 = vmatpush1.bf16.xpose.msra.mxu0 0
    %795 = vmatprep.subr.bf16.mxu0 0
    %796 = vmatpush1.bf16.xpose.msra.mxu0 %v779
    %797 = vmatprep.subr.bf16.mxu0 0
    %798 = vmatpush2.bf16.xpose.msra.mxu0 0
    %799 = vmatprep.subr.bf16.mxu0 0
    %800 = vmatpush2.bf16.xpose.msra.mxu0 0
    %801 = vmatprep.subr.bf16.mxu0 0
    %802 = vmatpush2.bf16.xpose.msra.mxu0 0
    %803 = vmatprep.subr.bf16.mxu0 0
    %804 = vmatpush2.bf16.xpose.msra.mxu0 0
    %805 = vmatprep.subr.bf16.mxu0 0
    %806 = vmatpush2.bf16.xpose.msra.mxu0 0
    %807 = vmatprep.subr.bf16.mxu0 0
    %808 = vmatpush2.bf16.xpose.msra.mxu0 0
    %809 = vmatprep.subr.bf16.mxu0 0
    %810 = vmatpush2.bf16.xpose.msra.mxu0 0
    %811 = vmatprep.subr.bf16.mxu0 0
    %812 = vmatpush2.bf16.xpose.msra.mxu0 0
    %813 = vmatprep.mubr.bf16.mxu0 0
    %814 = vmatmul.mubr.bf16.gmra.mxu0 %v776
    %v815 = vpop.f32.mrf.mxu0
    %v816 = vadd.f32 0.0, %v815
    %v817 = vpop.f32.mrf.mxu0
    %v818 = vpop.f32.mrf.mxu0
    %v819 = vpop.f32.mrf.mxu0
    %820 = vdwg.mxu0
    %v821 = vsel %vm369, %v816, -inf
    %822 = vmax.xlane.f32.xlu0 %v821
    %v823 = vpop.xlane.xlu0 %822
    %v824 = vsub.f32 %v816, %v823
    %v825 = vmul.f32 %v824, 1.442695
    %v826 = vpow.pop %v825
    %v827 = vsel %vm369, %v826, 0.0
    %828 = vadd.xlane.f32.xlu0 %v827
    %v829 = vpop.xlane.xlu0 %828
    %v830 = vrcp.pop %v829
    %v831 = vmul.f32 %v826, %v830
    %s832 = scalar_lea.vmem [#allocation15], 24
    %833 = vst.msk [vmem:[%s832] sm:$0xff] %vm369, %v831
    %v834 = vpack.c.bf16 %v831, %v831
    %836 = vrot.lane.b32.xlu0 %v719, 112
    %v837 = vpop.permute.xlu0 %836
    %v839 = vsel %vm369, %v834, 0
    %v842 = vsel %vm215, %v837, 0
    %844 = vmatprep.subr.bf16.mxu0 0
    %845 = vmatpush1.bf16.msra.mxu0 0
    %846 = vmatprep.subr.bf16.mxu0 0
    %847 = vmatpush1.bf16.msra.mxu0 0
    %848 = vmatprep.subr.bf16.mxu0 0
    %849 = vmatpush1.bf16.msra.mxu0 0
    %850 = vmatprep.subr.bf16.mxu0 0
    %851 = vmatpush1.bf16.msra.mxu0 0
    %852 = vmatprep.subr.bf16.mxu0 0
    %853 = vmatpush1.bf16.msra.mxu0 0
    %854 = vmatprep.subr.bf16.mxu0 0
    %855 = vmatpush1.bf16.msra.mxu0 0
    %856 = vmatprep.subr.bf16.mxu0 0
    %857 = vmatpush1.bf16.msra.mxu0 0
    %858 = vmatprep.subr.bf16.mxu0 0
    %859 = vmatpush1.bf16.msra.mxu0 %v842
    %860 = vmatprep.subr.bf16.mxu0 0
    %861 = vmatpush2.bf16.msra.mxu0 0
    %862 = vmatprep.subr.bf16.mxu0 0
    %863 = vmatpush2.bf16.msra.mxu0 0
    %864 = vmatprep.subr.bf16.mxu0 0
    %865 = vmatpush2.bf16.msra.mxu0 0
    %866 = vmatprep.subr.bf16.mxu0 0
    %867 = vmatpush2.bf16.msra.mxu0 0
    %868 = vmatprep.subr.bf16.mxu0 0
    %869 = vmatpush2.bf16.msra.mxu0 0
    %870 = vmatprep.subr.bf16.mxu0 0
    %871 = vmatpush2.bf16.msra.mxu0 0
    %872 = vmatprep.subr.bf16.mxu0 0
    %873 = vmatpush2.bf16.msra.mxu0 0
    %874 = vmatprep.subr.bf16.mxu0 0
    %875 = vmatpush2.bf16.msra.mxu0 0
    %876 = vmatprep.mubr.bf16.mxu0 0
    %877 = vmatmul.mubr.bf16.gmra.mxu0 %v839
    %v878 = vpop.f32.mrf.mxu0
    %v879 = vadd.f32 0.0, %v878
    %v880 = vpop.f32.mrf.mxu0
    %v881 = vpop.f32.mrf.mxu0
    %v882 = vpop.f32.mrf.mxu0
    %883 = vdwg.mxu0
    %v884 = vpack.c.bf16 %v879, %v879
    %v885 = vld [vmem:[#allocation13 + $0x8] sm:$0xf]
    %v886 = vld [vmem:[#allocation13 + $0xc] sm:$0xf]
    %v889 = vunpack.c.l.b16 %v885
    %v890 = vunpack.c.l.b16 %v886
    %v891 = vpack.c.b16 %v890, %v889
    %v894 = vsel %vm322, %v884, 0
    %896 = vmatprep.subr.bf16.mxu0 0
    %897 = vmatpush1.bf16.msra.mxu0 0
    %898 = vmatprep.subr.bf16.mxu0 0
    %899 = vmatpush1.bf16.msra.mxu0 0
    %900 = vmatprep.subr.bf16.mxu0 0
    %901 = vmatpush1.bf16.msra.mxu0 0
    %902 = vmatprep.subr.bf16.mxu0 0
    %903 = vmatpush1.bf16.msra.mxu0 0
    %904 = vmatprep.subr.bf16.mxu0 0
    %905 = vmatpush1.bf16.msra.mxu0 0
    %906 = vmatprep.subr.bf16.mxu0 0
    %907 = vmatpush1.bf16.msra.mxu0 0
    %908 = vmatprep.subr.bf16.mxu0 0
    %909 = vmatpush1.bf16.msra.mxu0 0
    %910 = vmatprep.subr.bf16.mxu0 0
    %911 = vmatpush1.bf16.msra.mxu0 %v891
    %912 = vmatprep.subr.bf16.mxu0 0
    %913 = vmatpush2.bf16.msra.mxu0 0
    %914 = vmatprep.subr.bf16.mxu0 0
    %915 = vmatpush2.bf16.msra.mxu0 0
    %916 = vmatprep.subr.bf16.mxu0 0
    %917 = vmatpush2.bf16.msra.mxu0 0
    %918 = vmatprep.subr.bf16.mxu0 0
    %919 = vmatpush2.bf16.msra.mxu0 0
    %920 = vmatprep.subr.bf16.mxu0 0
    %921 = vmatpush2.bf16.msra.mxu0 0
    %922 = vmatprep.subr.bf16.mxu0 0
    %923 = vmatpush2.bf16.msra.mxu0 0
    %924 = vmatprep.subr.bf16.mxu0 0
    %925 = vmatpush2.bf16.msra.mxu0 0
    %926 = vmatprep.subr.bf16.mxu0 0
    %927 = vmatpush2.bf16.msra.mxu0 0
    %928 = vmatprep.mubr.bf16.mxu0 0
    %929 = vmatmul.mubr.bf16.gmra.mxu0 %v894
    %v930 = vpop.f32.mrf.mxu0
    %v931 = vadd.f32 0.0, %v930
    %v932 = vpop.f32.mrf.mxu0
    %v933 = vpop.f32.mrf.mxu0
    %v934 = vpop.f32.mrf.mxu0
    %935 = vdwg.mxu0
    %v938 = vunpack.c.l.b16 %v767
    %v939 = vunpack.c.l.b16 %v768
    %v940 = vpack.c.b16 %v939, %v938
    %v943 = vsel %vm322, %v766, 0
    %945 = vmatprep.subr.bf16.mxu0 0
    %946 = vmatpush1.bf16.msra.mxu0 0
    %947 = vmatprep.subr.bf16.mxu0 0
    %948 = vmatpush1.bf16.msra.mxu0 0
    %949 = vmatprep.subr.bf16.mxu0 0
    %950 = vmatpush1.bf16.msra.mxu0 0
    %951 = vmatprep.subr.bf16.mxu0 0
    %952 = vmatpush1.bf16.msra.mxu0 0
    %953 = vmatprep.subr.bf16.mxu0 0
    %954 = vmatpush1.bf16.msra.mxu0 0
    %955 = vmatprep.subr.bf16.mxu0 0
    %956 = vmatpush1.bf16.msra.mxu0 0
    %957 = vmatprep.subr.bf16.mxu0 0
    %958 = vmatpush1.bf16.msra.mxu0 0
    %959 = vmatprep.subr.bf16.mxu0 0
    %960 = vmatpush1.bf16.msra.mxu0 %v940
    %961 = vmatprep.subr.bf16.mxu0 0
    %962 = vmatpush2.bf16.msra.mxu0 0
    %963 = vmatprep.subr.bf16.mxu0 0
    %964 = vmatpush2.bf16.msra.mxu0 0
    %965 = vmatprep.subr.bf16.mxu0 0
    %966 = vmatpush2.bf16.msra.mxu0 0
    %967 = vmatprep.subr.bf16.mxu0 0
    %968 = vmatpush2.bf16.msra.mxu0 0
    %969 = vmatprep.subr.bf16.mxu0 0
    %970 = vmatpush2.bf16.msra.mxu0 0
    %971 = vmatprep.subr.bf16.mxu0 0
    %972 = vmatpush2.bf16.msra.mxu0 0
    %973 = vmatprep.subr.bf16.mxu0 0
    %974 = vmatpush2.bf16.msra.mxu0 0
    %975 = vmatprep.subr.bf16.mxu0 0
    %976 = vmatpush2.bf16.msra.mxu0 0
    %977 = vmatprep.mubr.bf16.mxu0 0
    %978 = vmatmul.mubr.bf16.gmra.mxu0 %v943
    %v979 = vpop.f32.mrf.mxu0
    %v980 = vadd.f32 %v931, %v979
    %v981 = vpop.f32.mrf.mxu0
    %v982 = vpop.f32.mrf.mxu0
    %v983 = vpop.f32.mrf.mxu0
    %984 = vdwg.mxu0
    %v985 = vadd.f32 %v980, %v653
    %986 = vst.msk [vmem:[#allocation14 + $0x8] sm:$0xff] %vm154, %v985
    // Predicated region
    $region62: #{tpu_custom_call.1} parent=1 // pred_check
      _
    $region63: #{tpu_custom_call.1} parent=1 // pred_check_branch
      %988 = sbr.rel (0) target = $region65
    $region64: #{tpu_custom_call.1} parent=1 // pred_region
      %s990 = ssub.s32 256, 256
      %991 = vsyncadd [#allocation4], %s990
      %s992 = sshll.u32 [#allocation14], 4
      %s993 = int_to_ptr.vmem [resolvable:$true] %s992
      %998 = dma.vmem_to_hbm [thread:$0]  %s993, 256, %s8, [#allocation4], 128, 128, 8
    $region65: #{tpu_custom_call.1} parent=1 // pred_fallthru
      _
    // Predicated region
    $region66: #{tpu_custom_call.1} parent=1 // pred_check
      _
    $region67: #{tpu_custom_call.1} parent=1 // pred_check_branch
      %1000 = sbr.rel (0) target = $region69
    $region68: #{tpu_custom_call.1} parent=1 // pred_region
      %s1002 = ssub.s32 512, 512
      %1003 = vsyncadd [#allocation16], %s1002
      %s1004 = sshll.u32 [#allocation15], 4
      %s1005 = int_to_ptr.vmem [resolvable:$true] %s1004
      %1010 = dma.vmem_to_hbm [thread:$0]  %s1005, 512, %s9, [#allocation16], 128, 128, 8
    $region69: #{tpu_custom_call.1} parent=1 // pred_fallthru
      _
    // Predicated region
    $region70: #{tpu_custom_call.1} parent=1 // pred_check
      _
    $region71: #{tpu_custom_call.1} parent=1 // pred_check_branch
      %1012 = sbr.rel (0) target = $region73
    $region72: #{tpu_custom_call.1} parent=1 // pred_region
      %1013 = dma.done [#allocation4], 256
    $region73: #{tpu_custom_call.1} parent=1 // pred_fallthru
      _
    // Predicated region
    $region74: #{tpu_custom_call.1} parent=1 // pred_check
      _
    $region75: #{tpu_custom_call.1} parent=1 // pred_check_branch
      %1015 = sbr.rel (0) target = $region77
    $region76: #{tpu_custom_call.1} parent=1 // pred_region
      %1016 = dma.done [#allocation16], 512
    $region77: #{tpu_custom_call.1} parent=1 // pred_fallthru
      _
    %1017 = vsyncpa [#allocation3], 1
    %1018 = vsyncpa [#allocation6], 1
    %1019 = vsyncpa [#allocation9], 1
    %1020 = vsyncpa [#allocation12], 1
    %1021 = vsyncpa [#allocation4], 1
    %1022 = vsyncpa [#allocation16], 1

</llo_original>
